<compile_context>
chip_gen: v7x
topology: tpu7x:2x2x1
jax: 0.10.0
libtpu: 0.0.40
codegen_flags: <defaults>
</compile_context>

<pallas_src>
import functools

import jax
import jax.numpy as jnp
from jax.experimental import pallas as pl
from jax.experimental.pallas import tpu as pltpu

# Logical sizes of the PyTorch Network.
D_IN, H1, H2, H3, D_OUT = 10, 128, 64, 32, 3
HP = 128                      # hidden widths zero-padded to one full lane group
DEFAULT_BLOCK_BATCH = 2048    # 2048+ rows amortizes the ~0.35us per-step cost


def _round_up(n, m):
    return (n + m - 1) // m * m


def _pad_to(a, shape):
    return jnp.pad(a, [(0, t - s) for s, t in zip(a.shape, shape)])


def mlp_kernel(x_ref, w1_ref, b1_ref, w2_ref, b2_ref,
               w3_ref, b3_ref, w4_ref, b4_ref, o_ref):
    """One (BT, D_IN) batch tile -> (BT, D_OUT) logits tile, fully fused."""
    # Layer 1: Linear(10 -> 128) + ReLU.  MXU matmul, f32 accumulation.
    h = jnp.dot(x_ref[...], w1_ref[...], preferred_element_type=jnp.float32)
    h = jnp.maximum(h + b1_ref[...], 0.0)
    # Layer 2: Linear(128 -> 64), zero-padded to 128 lanes, + ReLU.
    h = jnp.dot(h.astype(w2_ref.dtype), w2_ref[...],
                preferred_element_type=jnp.float32)
    h = jnp.maximum(h + b2_ref[...], 0.0)
    # Layer 3: Linear(64 -> 32), zero-padded to 128 lanes, + ReLU.
    h = jnp.dot(h.astype(w3_ref.dtype), w3_ref[...],
                preferred_element_type=jnp.float32)
    h = jnp.maximum(h + b3_ref[...], 0.0)
    # Layer 4: Linear(32 -> 3), logits (no activation).
    o = jnp.dot(h.astype(w4_ref.dtype), w4_ref[...],
                preferred_element_type=jnp.float32)
    o_ref[...] = (o + b4_ref[...]).astype(o_ref.dtype)
    # TODO(synk): training-mode Dropout(p=0.2) not implemented; this forward is
    # eval/inference semantics (dropout == identity), matching PyTorch .eval().


def mlp_forward(x, params, *, block_batch=DEFAULT_BLOCK_BATCH,
                compute_dtype=jnp.bfloat16):
    """x: (B, 10) float32. params: weights (in, out), biases (out,). -> (B, 3)."""
    expected_w = {"w1": (D_IN, H1), "w2": (H1, H2), "w3": (H2, H3), "w4": (H3, D_OUT)}
    expected_b = {"b1": H1, "b2": H2, "b3": H3, "b4": D_OUT}
    for k, shp in expected_w.items():
        got = tuple(params[k].shape)
        assert got == shp, (
            f"{k} must be (in_features, out_features)={shp} "
            f"(transpose of torch Linear.weight); got {got}")
    for k, n in expected_b.items():
        got = tuple(params[k].shape)
        assert got in ((n,), (1, n)), (k, got)

    B = x.shape[0]
    assert x.shape[1] == D_IN, x.shape

    # Batch tiling: one grid step per BT rows; pad batch so the grid is exact.
    bt = min(block_batch, _round_up(B, 8))
    b_pad = _round_up(B, bt)
    xp = x if b_pad == B else jnp.pad(x, ((0, b_pad - B), (0, 0)))
    xp = xp.astype(compute_dtype)

    f32 = jnp.float32
    # bf16 matmul operands (MXU-native); biases kept f32 (2-D for TPU layout).
    # Hidden widths 64/32 zero-padded to 128 for lane-dense activations.
    w1 = params["w1"].astype(compute_dtype)
    b1 = params["b1"].reshape(1, H1).astype(f32)
    w2 = _pad_to(params["w2"], (H1, HP)).astype(compute_dtype)
    b2 = _pad_to(params["b2"].reshape(1, H2), (1, HP)).astype(f32)
    w3 = _pad_to(params["w3"], (HP, HP)).astype(compute_dtype)
    b3 = _pad_to(params["b3"].reshape(1, H3), (1, HP)).astype(f32)
    w4 = _pad_to(params["w4"], (HP, D_OUT)).astype(compute_dtype)
    b4 = params["b4"].reshape(1, D_OUT).astype(f32)
    weight_args = (w1, b1, w2, b2, w3, b3, w4, b4)

    def resident(shape):
        # Constant index map: block never changes across grid steps, so Pallas
        # does not re-DMA -> weights/biases are fetched from HBM exactly once.
        return pl.BlockSpec(shape, lambda i: (0, 0))

    in_specs = [pl.BlockSpec((bt, D_IN), lambda i: (i, 0))]
    in_specs += [resident(tuple(w.shape)) for w in weight_args]
    out_spec = pl.BlockSpec((bt, D_OUT), lambda i: (i, 0))

    out_padded = pl.pallas_call(
        mlp_kernel,
        out_shape=jax.ShapeDtypeStruct((b_pad, D_OUT), jnp.float32),
        grid=(pl.cdiv(b_pad, bt),),
        in_specs=in_specs,
        out_specs=out_spec,
        compiler_params=pltpu.CompilerParams(
            # Independent batch tiles -> megacore-shard across TCs (v7x).
            dimension_semantics=("parallel",),
            # Explicit VMEM budget sized against v7x (64 MiB physical,
            # 32 MiB default scoped); this kernel needs only a few MiB.
            vmem_limit_bytes=32 * 1024 * 1024,
        ),
    )(xp, *weight_args)
    return out_padded[:B]


def init_params(key):
    """PyTorch-Linear-like init; weights stored as (in_features, out_features)."""
    dims = [(D_IN, H1), (H1, H2), (H2, H3), (H3, D_OUT)]
    params = {}
    for i, (fan_in, fan_out) in enumerate(dims, start=1):
        key, kw, kb = jax.random.split(key, 3)
        bound = 1.0 / float(fan_in) ** 0.5
        params[f"w{i}"] = jax.random.uniform(
            kw, (fan_in, fan_out), jnp.float32, minval=-bound, maxval=bound)
        params[f"b{i}"] = jax.random.uniform(
            kb, (fan_out,), jnp.float32, minval=-bound, maxval=bound)
    return params


def reference_forward(x, params, compute_dtype=jnp.float32):
    """Plain-JAX reference; same matmul-operand dtype as the kernel when asked."""
    def linear(h, w, b):
        return jnp.dot(h.astype(compute_dtype), w.astype(compute_dtype),
                       preferred_element_type=jnp.float32) + b.reshape(1, -1)
    h = jnp.maximum(linear(x, params["w1"], params["b1"]), 0.0)
    h = jnp.maximum(linear(h, params["w2"], params["b2"]), 0.0)
    h = jnp.maximum(linear(h, params["w3"], params["b3"]), 0.0)
    return linear(h, params["w4"], params["b4"])


if __name__ == "__main__":
    key = jax.random.PRNGKey(0)
    key, kx = jax.random.split(key)
    batch = 8  # small smoke-test shape; the kernel targets large batches.
    x = jax.random.normal(kx, (batch, D_IN), dtype=jnp.float32)
    params = init_params(key)

    fwd = jax.jit(functools.partial(mlp_forward, compute_dtype=jnp.bfloat16))
    out = jax.block_until_ready(fwd(x, params))
    assert out.shape == (batch, D_OUT), out.shape

    # Tight check vs a reference using the same bf16 operands / f32 accumulation.
    ref_bf16 = reference_forward(x, params, compute_dtype=jnp.bfloat16)
    assert jnp.allclose(out, ref_bf16, atol=1e-4, rtol=1e-4), "mismatch vs bf16 reference"
    # Loose sanity check vs full-f32 math (bf16 matmul operands cost ~1e-2 abs).
    ref_f32 = reference_forward(x, params, compute_dtype=jnp.float32)
    assert jnp.allclose(out, ref_f32, atol=1e-1, rtol=1e-1), "mismatch vs f32 reference"

    # NOTE: at batch=8 this is pure launch/DMA overhead vs plain XLA fusion;
    # benchmark only at representative large batches using xprof trace minimums.
    print("KERNEL_OK")
</pallas_src>

<mosaic_0001>
module attributes {stable_mosaic.version = 11 : i64} {
  func.func @mlp_kernel(%arg0: i32, %arg1: memref<8x10xbf16, #tpu.memory_space<vmem>>, %arg2: memref<10x128xbf16, #tpu.memory_space<vmem>>, %arg3: memref<1x128xf32, #tpu.memory_space<vmem>>, %arg4: memref<128x128xbf16, #tpu.memory_space<vmem>>, %arg5: memref<1x128xf32, #tpu.memory_space<vmem>>, %arg6: memref<128x128xbf16, #tpu.memory_space<vmem>>, %arg7: memref<1x128xf32, #tpu.memory_space<vmem>>, %arg8: memref<128x3xbf16, #tpu.memory_space<vmem>>, %arg9: memref<1x3xf32, #tpu.memory_space<vmem>>, %arg10: memref<8x3xf32, #tpu.memory_space<vmem>>) attributes {dimension_semantics = [#tpu.dimension_semantics<parallel>], iteration_bounds = array<i64: 1>, scalar_prefetch = 0 : i64, scratch_operands = 0 : i64, tpu.core_type = #tpu.core_type<tc>, window_params = [{transform_indices = @transform_0, window_bounds = array<i64: 8, 10>}, {pipeline_mode = #tpu.pipeline_mode<synchronous>, transform_indices = @transform_1, window_bounds = array<i64: 10, 128>}, {pipeline_mode = #tpu.pipeline_mode<synchronous>, transform_indices = @transform_2, window_bounds = array<i64: 1, 128>}, {pipeline_mode = #tpu.pipeline_mode<synchronous>, transform_indices = @transform_3, window_bounds = array<i64: 128, 128>}, {pipeline_mode = #tpu.pipeline_mode<synchronous>, transform_indices = @transform_4, window_bounds = array<i64: 1, 128>}, {pipeline_mode = #tpu.pipeline_mode<synchronous>, transform_indices = @transform_5, window_bounds = array<i64: 128, 128>}, {pipeline_mode = #tpu.pipeline_mode<synchronous>, transform_indices = @transform_6, window_bounds = array<i64: 1, 128>}, {pipeline_mode = #tpu.pipeline_mode<synchronous>, transform_indices = @transform_7, window_bounds = array<i64: 128, 3>}, {pipeline_mode = #tpu.pipeline_mode<synchronous>, transform_indices = @transform_8, window_bounds = array<i64: 1, 3>}, {transform_indices = @transform_9, window_bounds = array<i64: 8, 3>}]} {
    %c0 = arith.constant 0 : index
    %c0_0 = arith.constant 0 : index
    %0 = vector.load %arg1[%c0, %c0_0] : memref<8x10xbf16, #tpu.memory_space<vmem>>, vector<8x10xbf16>
    %c0_1 = arith.constant 0 : index
    %c0_2 = arith.constant 0 : index
    %1 = vector.load %arg2[%c0_1, %c0_2] : memref<10x128xbf16, #tpu.memory_space<vmem>>, vector<10x128xbf16>
    %cst = arith.constant dense<0.000000e+00> : vector<8x128xf32>
    %2 = tpu.matmul %0, %1, %cst {dimension_numbers = #tpu.dot_dimension_numbers<[1], [0], [0], [1], [0, 0, 1, 1], [], []>} : vector<8x10xbf16>, vector<10x128xbf16>, vector<8x128xf32> -> vector<8x128xf32>
    %c0_3 = arith.constant 0 : index
    %c0_4 = arith.constant 0 : index
    %3 = vector.load %arg3[%c0_3, %c0_4] : memref<1x128xf32, #tpu.memory_space<vmem>>, vector<1x128xf32>
    %4 = vector.broadcast %3 : vector<1x128xf32> to vector<8x128xf32>
    %5 = arith.addf %2, %4 : vector<8x128xf32>
    %cst_5 = arith.constant 0.000000e+00 : f32
    %6 = vector.broadcast %cst_5 : f32 to vector<8x128xf32>
    %7 = arith.maximumf %5, %6 : vector<8x128xf32>
    %8 = arith.truncf %7 : vector<8x128xf32> to vector<8x128xbf16>
    %c0_6 = arith.constant 0 : index
    %c0_7 = arith.constant 0 : index
    %9 = vector.load %arg4[%c0_6, %c0_7] : memref<128x128xbf16, #tpu.memory_space<vmem>>, vector<128x128xbf16>
    %cst_8 = arith.constant dense<0.000000e+00> : vector<8x128xf32>
    %10 = tpu.matmul %8, %9, %cst_8 {dimension_numbers = #tpu.dot_dimension_numbers<[1], [0], [0], [1], [0, 0, 1, 1], [], []>} : vector<8x128xbf16>, vector<128x128xbf16>, vector<8x128xf32> -> vector<8x128xf32>
    %c0_9 = arith.constant 0 : index
    %c0_10 = arith.constant 0 : index
    %11 = vector.load %arg5[%c0_9, %c0_10] : memref<1x128xf32, #tpu.memory_space<vmem>>, vector<1x128xf32>
    %12 = vector.broadcast %11 : vector<1x128xf32> to vector<8x128xf32>
    %13 = arith.addf %10, %12 : vector<8x128xf32>
    %cst_11 = arith.constant 0.000000e+00 : f32
    %14 = vector.broadcast %cst_11 : f32 to vector<8x128xf32>
    %15 = arith.maximumf %13, %14 : vector<8x128xf32>
    %16 = arith.truncf %15 : vector<8x128xf32> to vector<8x128xbf16>
    %c0_12 = arith.constant 0 : index
    %c0_13 = arith.constant 0 : index
    %17 = vector.load %arg6[%c0_12, %c0_13] : memref<128x128xbf16, #tpu.memory_space<vmem>>, vector<128x128xbf16>
    %cst_14 = arith.constant dense<0.000000e+00> : vector<8x128xf32>
    %18 = tpu.matmul %16, %17, %cst_14 {dimension_numbers = #tpu.dot_dimension_numbers<[1], [0], [0], [1], [0, 0, 1, 1], [], []>} : vector<8x128xbf16>, vector<128x128xbf16>, vector<8x128xf32> -> vector<8x128xf32>
    %c0_15 = arith.constant 0 : index
    %c0_16 = arith.constant 0 : index
    %19 = vector.load %arg7[%c0_15, %c0_16] : memref<1x128xf32, #tpu.memory_space<vmem>>, vector<1x128xf32>
    %20 = vector.broadcast %19 : vector<1x128xf32> to vector<8x128xf32>
    %21 = arith.addf %18, %20 : vector<8x128xf32>
    %cst_17 = arith.constant 0.000000e+00 : f32
    %22 = vector.broadcast %cst_17 : f32 to vector<8x128xf32>
    %23 = arith.maximumf %21, %22 : vector<8x128xf32>
    %24 = arith.truncf %23 : vector<8x128xf32> to vector<8x128xbf16>
    %c0_18 = arith.constant 0 : index
    %c0_19 = arith.constant 0 : index
    %25 = vector.load %arg8[%c0_18, %c0_19] : memref<128x3xbf16, #tpu.memory_space<vmem>>, vector<128x3xbf16>
    %cst_20 = arith.constant dense<0.000000e+00> : vector<8x3xf32>
    %26 = tpu.matmul %24, %25, %cst_20 {dimension_numbers = #tpu.dot_dimension_numbers<[1], [0], [0], [1], [0, 0, 1, 1], [], []>} : vector<8x128xbf16>, vector<128x3xbf16>, vector<8x3xf32> -> vector<8x3xf32>
    %c0_21 = arith.constant 0 : index
    %c0_22 = arith.constant 0 : index
    %27 = vector.load %arg9[%c0_21, %c0_22] : memref<1x3xf32, #tpu.memory_space<vmem>>, vector<1x3xf32>
    %28 = vector.broadcast %27 : vector<1x3xf32> to vector<8x3xf32>
    %29 = arith.addf %26, %28 : vector<8x3xf32>
    %c0_23 = arith.constant 0 : index
    %c0_24 = arith.constant 0 : index
    %30 = vector.load %arg10[%c0_23, %c0_24] : memref<8x3xf32, #tpu.memory_space<vmem>>, vector<8x3xf32>
    tpu.vector_store %arg10[%c0_23, %c0_24], %29 {strides = array<i32>} : memref<8x3xf32, #tpu.memory_space<vmem>>, vector<8x3xf32>,
    return
  }
  func.func @transform_0(%arg0: i32) -> (i32, i32) {
    %c0_i32 = arith.constant 0 : i32
    %c0_i32_0 = arith.constant 0 : i32
    return %arg0, %c0_i32 : i32, i32
  }
  func.func @transform_1(%arg0: i32) -> (i32, i32) {
    %c0_i32 = arith.constant 0 : i32
    %c0_i32_0 = arith.constant 0 : i32
    %c0_i32_1 = arith.constant 0 : i32
    return %c0_i32, %c0_i32_0 : i32, i32
  }
  func.func @transform_2(%arg0: i32) -> (i32, i32) {
    %c0_i32 = arith.constant 0 : i32
    %c0_i32_0 = arith.constant 0 : i32
    %c0_i32_1 = arith.constant 0 : i32
    return %c0_i32, %c0_i32_0 : i32, i32
  }
  func.func @transform_3(%arg0: i32) -> (i32, i32) {
    %c0_i32 = arith.constant 0 : i32
    %c0_i32_0 = arith.constant 0 : i32
    %c0_i32_1 = arith.constant 0 : i32
    return %c0_i32, %c0_i32_0 : i32, i32
  }
  func.func @transform_4(%arg0: i32) -> (i32, i32) {
    %c0_i32 = arith.constant 0 : i32
    %c0_i32_0 = arith.constant 0 : i32
    %c0_i32_1 = arith.constant 0 : i32
    return %c0_i32, %c0_i32_0 : i32, i32
  }
  func.func @transform_5(%arg0: i32) -> (i32, i32) {
    %c0_i32 = arith.constant 0 : i32
    %c0_i32_0 = arith.constant 0 : i32
    %c0_i32_1 = arith.constant 0 : i32
    return %c0_i32, %c0_i32_0 : i32, i32
  }
  func.func @transform_6(%arg0: i32) -> (i32, i32) {
    %c0_i32 = arith.constant 0 : i32
    %c0_i32_0 = arith.constant 0 : i32
    %c0_i32_1 = arith.constant 0 : i32
    return %c0_i32, %c0_i32_0 : i32, i32
  }
  func.func @transform_7(%arg0: i32) -> (i32, i32) {
    %c0_i32 = arith.constant 0 : i32
    %c0_i32_0 = arith.constant 0 : i32
    %c0_i32_1 = arith.constant 0 : i32
    return %c0_i32, %c0_i32_0 : i32, i32
  }
  func.func @transform_8(%arg0: i32) -> (i32, i32) {
    %c0_i32 = arith.constant 0 : i32
    %c0_i32_0 = arith.constant 0 : i32
    %c0_i32_1 = arith.constant 0 : i32
    return %c0_i32, %c0_i32_0 : i32, i32
  }
  func.func @transform_9(%arg0: i32) -> (i32, i32) {
    %c0_i32 = arith.constant 0 : i32
    %c0_i32_0 = arith.constant 0 : i32
    return %arg0, %c0_i32 : i32, i32
  }
}

</mosaic_0001>

<llo_original>
// kernel: mlp_forward.1
$region0: #{mlp_forward.1}
  #allocation0 [shape = 'u32[]', space=smem, size = 0x4, offset = 0x4, fixed_abs, tag = 'smem constant byte address 0x4 - core index']
  #allocation1 [shape = 'u32[144,128]{1,0:T(1,128)}', space=vmem, size = 0x12000, scoped, tag = 'internal scratch']
  %s0 = inlined_call_operand.vmem [shape: bf16[8,10], index: 0, kind: input, shape index: {}]
  %s1 = inlined_call_operand.vmem [shape: bf16[10,128], index: 1, kind: input, shape index: {}]
  %s2 = inlined_call_operand.vmem [shape: f32[1,128], index: 2, kind: input, shape index: {}]
  %s3 = inlined_call_operand.vmem [shape: bf16[128,128], index: 3, kind: input, shape index: {}]
  %s4 = inlined_call_operand.vmem [shape: f32[1,128], index: 4, kind: input, shape index: {}]
  %s5 = inlined_call_operand.vmem [shape: bf16[128,128], index: 5, kind: input, shape index: {}]
  %s6 = inlined_call_operand.vmem [shape: f32[1,128], index: 6, kind: input, shape index: {}]
  %s7 = inlined_call_operand.vmem [shape: bf16[128,3], index: 7, kind: input, shape index: {}]
  %s8 = inlined_call_operand.vmem [shape: f32[1,3], index: 8, kind: input, shape index: {}]
  %s9 = inlined_call_operand.vmem [shape: f32[8,3], index: 9, kind: output, shape index: {}]
  %s10 = sld [smem:[#allocation0]]
  $region46: #{mlp_forward.1} parent=0
    _
  %s12 = ssub.s32 1, %s10
  %s13 = scalar_select 0, %s12, %s10
  // Predicated region
  $region2: #{mlp_forward.1} parent=0 // pred_check
    _
  $region3: #{mlp_forward.1} parent=0 // pred_check_branch
    %15 = sbr.rel (0) target = $region5
  $region4: #{mlp_forward.1} parent=0 // pred_region
    _
  $region5: #{mlp_forward.1} parent=0 // pred_fallthru
    _
  // Predicated region
  $region6: #{mlp_forward.1} parent=0 // pred_check
    _
  $region7: #{mlp_forward.1} parent=0 // pred_check_branch
    %17 = sbr.rel (0) target = $region9
  $region8: #{mlp_forward.1} parent=0 // pred_region
    _
  $region9: #{mlp_forward.1} parent=0 // pred_fallthru
    _
  // Predicated region
  $region10: #{mlp_forward.1} parent=0 // pred_check
    _
  $region11: #{mlp_forward.1} parent=0 // pred_check_branch
    %19 = sbr.rel (0) target = $region13
  $region12: #{mlp_forward.1} parent=0 // pred_region
    _
  $region13: #{mlp_forward.1} parent=0 // pred_fallthru
    _
  // Predicated region
  $region14: #{mlp_forward.1} parent=0 // pred_check
    _
  $region15: #{mlp_forward.1} parent=0 // pred_check_branch
    %21 = sbr.rel (0) target = $region17
  $region16: #{mlp_forward.1} parent=0 // pred_region
    _
  $region17: #{mlp_forward.1} parent=0 // pred_fallthru
    _
  // Predicated region
  $region18: #{mlp_forward.1} parent=0 // pred_check
    _
  $region19: #{mlp_forward.1} parent=0 // pred_check_branch
    %23 = sbr.rel (0) target = $region21
  $region20: #{mlp_forward.1} parent=0 // pred_region
    _
  $region21: #{mlp_forward.1} parent=0 // pred_fallthru
    _
  // Predicated region
  $region22: #{mlp_forward.1} parent=0 // pred_check
    _
  $region23: #{mlp_forward.1} parent=0 // pred_check_branch
    %25 = sbr.rel (0) target = $region25
  $region24: #{mlp_forward.1} parent=0 // pred_region
    _
  $region25: #{mlp_forward.1} parent=0 // pred_fallthru
    _
  // Predicated region
  $region26: #{mlp_forward.1} parent=0 // pred_check
    _
  $region27: #{mlp_forward.1} parent=0 // pred_check_branch
    %27 = sbr.rel (0) target = $region29
  $region28: #{mlp_forward.1} parent=0 // pred_region
    _
  $region29: #{mlp_forward.1} parent=0 // pred_fallthru
    _
  // Predicated region
  $region30: #{mlp_forward.1} parent=0 // pred_check
    _
  $region31: #{mlp_forward.1} parent=0 // pred_check_branch
    %29 = sbr.rel (0) target = $region33
  $region32: #{mlp_forward.1} parent=0 // pred_region
    _
  $region33: #{mlp_forward.1} parent=0 // pred_fallthru
    _
  // Predicated region
  $region34: #{mlp_forward.1} parent=0 // pred_check
    _
  $region35: #{mlp_forward.1} parent=0 // pred_check_branch
    %31 = sbr.rel (0) target = $region37
  $region36: #{mlp_forward.1} parent=0 // pred_region
    _
  $region37: #{mlp_forward.1} parent=0 // pred_fallthru
    _
  %v33 = vld [vmem:[%s0] sm:$0xf]
  %v34 = vld [vmem:[%s1] sm:$0xf]
  %v35 = vld [vmem:[%s1 + $0x4] sm:$0x1]
  %v36 = vld [vmem:[%s2] sm:$0x1]
  %v38 = vlaneseq
  %v39 = vshrl.u32 %v38, 7
  %v40 = vsub.s32 0, %v39
  %v41 = vrot.slane %v36, %v40
  %v45 = vunpack.c.l.b16 %v34
  %v46 = vunpack.c.l.b16 %v35
  %v47 = vpack.c.b16 %v46, %v45
  %vm48 = vcmask 80896
  %v50 = vsel %vm48, %v33, 0
  %vm52 = vcmask 1044480
  %v54 = vsel %vm52, %v47, 0
  %56 = vmatprep.subr.bf16.mxu0 0
  %57 = vmatpush1.bf16.msra.mxu0 %v54
  %58 = vmatprep.subr.bf16.mxu0 0
  %59 = vmatpush1.bf16.msra.mxu0 0
  %60 = vmatprep.subr.bf16.mxu0 0
  %61 = vmatpush1.bf16.msra.mxu0 0
  %62 = vmatprep.subr.bf16.mxu0 0
  %63 = vmatpush1.bf16.msra.mxu0 0
  %64 = vmatprep.subr.bf16.mxu0 0
  %65 = vmatpush1.bf16.msra.mxu0 0
  %66 = vmatprep.subr.bf16.mxu0 0
  %67 = vmatpush1.bf16.msra.mxu0 0
  %68 = vmatprep.subr.bf16.mxu0 0
  %69 = vmatpush1.bf16.msra.mxu0 0
  %70 = vmatprep.subr.bf16.mxu0 0
  %71 = vmatpush1.bf16.msra.mxu0 0
  %72 = vmatprep.subr.bf16.mxu0 0
  %73 = vmatpush1.bf16.msra.mxu0 0
  %74 = vmatprep.subr.bf16.mxu0 0
  %75 = vmatpush1.bf16.msra.mxu0 0
  %76 = vmatprep.subr.bf16.mxu0 0
  %77 = vmatpush1.bf16.msra.mxu0 0
  %78 = vmatprep.subr.bf16.mxu0 0
  %79 = vmatpush1.bf16.msra.mxu0 0
  %80 = vmatprep.subr.bf16.mxu0 0
  %81 = vmatpush1.bf16.msra.mxu0 0
  %82 = vmatprep.subr.bf16.mxu0 0
  %83 = vmatpush1.bf16.msra.mxu0 0
  %84 = vmatprep.subr.bf16.mxu0 0
  %85 = vmatpush1.bf16.msra.mxu0 0
  %86 = vmatprep.subr.bf16.mxu0 0
  %87 = vmatpush1.bf16.msra.mxu0 0
  %88 = vmatprep.mubr.bf16.mxu0 0
  %89 = vmatmul.mubr.bf16.gmra.mrb[0].mxu0 %v50
  %v90 = vpop.f32.mrb[0].mxu0
  %v91 = vadd.f32 %v41, %v90
  %v92 = vpop.f32.mrb[0].mxu0
  %v93 = vpop.f32.mrb[0].mxu0
  %v94 = vpop.f32.mrb[0].mxu0
  %95 = vdwg.mxu0
  %v96 = vmax.f32 %v91, 0.0
  %v97 = vpack.c.bf16 %v96, %v96
  %v98 = vld [vmem:[%s3] sm:$0xf]
  %v99 = vld [vmem:[%s3 + $0x4] sm:$0xf]
  %v100 = vld [vmem:[%s3 + $0x8] sm:$0xf]
  %v101 = vld [vmem:[%s3 + $0xc] sm:$0xf]
  %v102 = vld [vmem:[%s3 + $0x10] sm:$0xf]
  %v103 = vld [vmem:[%s3 + $0x14] sm:$0xf]
  %v104 = vld [vmem:[%s3 + $0x18] sm:$0xf]
  %v105 = vld [vmem:[%s3 + $0x1c] sm:$0xf]
  %v106 = vld [vmem:[%s3 + $0x20] sm:$0xf]
  %v107 = vld [vmem:[%s3 + $0x24] sm:$0xf]
  %v108 = vld [vmem:[%s3 + $0x28] sm:$0xf]
  %v109 = vld [vmem:[%s3 + $0x2c] sm:$0xf]
  %v110 = vld [vmem:[%s3 + $0x30] sm:$0xf]
  %v111 = vld [vmem:[%s3 + $0x34] sm:$0xf]
  %v112 = vld [vmem:[%s3 + $0x38] sm:$0xf]
  %v113 = vld [vmem:[%s3 + $0x3c] sm:$0xf]
  %v114 = vld [vmem:[%s4] sm:$0x1]
  %v116 = vlaneseq
  %v117 = vshrl.u32 %v116, 7
  %v118 = vsub.s32 0, %v117
  %v119 = vrot.slane %v114, %v118
  %v137 = vunpack.c.l.b16 %v98
  %v138 = vunpack.c.l.b16 %v99
  %v139 = vunpack.c.l.b16 %v100
  %v140 = vunpack.c.l.b16 %v101
  %v141 = vunpack.c.l.b16 %v102
  %v142 = vunpack.c.l.b16 %v103
  %v143 = vunpack.c.l.b16 %v104
  %v144 = vunpack.c.l.b16 %v105
  %v145 = vunpack.c.l.b16 %v106
  %v146 = vunpack.c.l.b16 %v107
  %v147 = vunpack.c.l.b16 %v108
  %v148 = vunpack.c.l.b16 %v109
  %v149 = vunpack.c.l.b16 %v110
  %v150 = vunpack.c.l.b16 %v111
  %v151 = vunpack.c.l.b16 %v112
  %v152 = vunpack.c.l.b16 %v113
  %v153 = vpack.c.b16 %v138, %v137
  %v154 = vpack.c.b16 %v140, %v139
  %v155 = vpack.c.b16 %v142, %v141
  %v156 = vpack.c.b16 %v144, %v143
  %v157 = vpack.c.b16 %v146, %v145
  %v158 = vpack.c.b16 %v148, %v147
  %v159 = vpack.c.b16 %v150, %v149
  %v160 = vpack.c.b16 %v152, %v151
  %169 = vmatprep.subr.bf16.mxu0 0
  %170 = vmatpush1.bf16.msra.mxu0 %v153
  %171 = vmatprep.subr.bf16.mxu0 0
  %172 = vmatpush1.bf16.msra.mxu0 %v154
  %173 = vmatprep.subr.bf16.mxu0 0
  %174 = vmatpush1.bf16.msra.mxu0 %v155
  %175 = vmatprep.subr.bf16.mxu0 0
  %176 = vmatpush1.bf16.msra.mxu0 %v156
  %177 = vmatprep.subr.bf16.mxu0 0
  %178 = vmatpush1.bf16.msra.mxu0 %v157
  %179 = vmatprep.subr.bf16.mxu0 0
  %180 = vmatpush1.bf16.msra.mxu0 %v158
  %181 = vmatprep.subr.bf16.mxu0 0
  %182 = vmatpush1.bf16.msra.mxu0 %v159
  %183 = vmatprep.subr.bf16.mxu0 0
  %184 = vmatpush1.bf16.msra.mxu0 %v160
  %185 = vmatprep.subr.bf16.mxu0 0
  %186 = vmatpush1.bf16.msra.mxu0 0
  %187 = vmatprep.subr.bf16.mxu0 0
  %188 = vmatpush1.bf16.msra.mxu0 0
  %189 = vmatprep.subr.bf16.mxu0 0
  %190 = vmatpush1.bf16.msra.mxu0 0
  %191 = vmatprep.subr.bf16.mxu0 0
  %192 = vmatpush1.bf16.msra.mxu0 0
  %193 = vmatprep.subr.bf16.mxu0 0
  %194 = vmatpush1.bf16.msra.mxu0 0
  %195 = vmatprep.subr.bf16.mxu0 0
  %196 = vmatpush1.bf16.msra.mxu0 0
  %197 = vmatprep.subr.bf16.mxu0 0
  %198 = vmatpush1.bf16.msra.mxu0 0
  %199 = vmatprep.subr.bf16.mxu0 0
  %200 = vmatpush1.bf16.msra.mxu0 0
  %201 = vmatprep.mubr.bf16.mxu0 0
  %202 = vmatmul.mubr.bf16.gmra.mrb[0].mxu0 %v97
  %v203 = vpop.f32.mrb[0].mxu0
  %v204 = vadd.f32 %v119, %v203
  %v205 = vpop.f32.mrb[0].mxu0
  %v206 = vpop.f32.mrb[0].mxu0
  %v207 = vpop.f32.mrb[0].mxu0
  %208 = vdwg.mxu0
  %v209 = vmax.f32 %v204, 0.0
  %v210 = vpack.c.bf16 %v209, %v209
  %v211 = vld [vmem:[%s5] sm:$0xf]
  %v212 = vld [vmem:[%s5 + $0x4] sm:$0xf]
  %v213 = vld [vmem:[%s5 + $0x8] sm:$0xf]
  %v214 = vld [vmem:[%s5 + $0xc] sm:$0xf]
  %v215 = vld [vmem:[%s5 + $0x10] sm:$0xf]
  %v216 = vld [vmem:[%s5 + $0x14] sm:$0xf]
  %v217 = vld [vmem:[%s5 + $0x18] sm:$0xf]
  %v218 = vld [vmem:[%s5 + $0x1c] sm:$0xf]
  %v219 = vld [vmem:[%s5 + $0x20] sm:$0xf]
  %v220 = vld [vmem:[%s5 + $0x24] sm:$0xf]
  %v221 = vld [vmem:[%s5 + $0x28] sm:$0xf]
  %v222 = vld [vmem:[%s5 + $0x2c] sm:$0xf]
  %v223 = vld [vmem:[%s5 + $0x30] sm:$0xf]
  %v224 = vld [vmem:[%s5 + $0x34] sm:$0xf]
  %v225 = vld [vmem:[%s5 + $0x38] sm:$0xf]
  %v226 = vld [vmem:[%s5 + $0x3c] sm:$0xf]
  %v227 = vld [vmem:[%s6] sm:$0x1]
  %v229 = vlaneseq
  %v230 = vshrl.u32 %v229, 7
  %v231 = vsub.s32 0, %v230
  %v232 = vrot.slane %v227, %v231
  %v250 = vunpack.c.l.b16 %v211
  %v251 = vunpack.c.l.b16 %v212
  %v252 = vunpack.c.l.b16 %v213
  %v253 = vunpack.c.l.b16 %v214
  %v254 = vunpack.c.l.b16 %v215
  %v255 = vunpack.c.l.b16 %v216
  %v256 = vunpack.c.l.b16 %v217
  %v257 = vunpack.c.l.b16 %v218
  %v258 = vunpack.c.l.b16 %v219
  %v259 = vunpack.c.l.b16 %v220
  %v260 = vunpack.c.l.b16 %v221
  %v261 = vunpack.c.l.b16 %v222
  %v262 = vunpack.c.l.b16 %v223
  %v263 = vunpack.c.l.b16 %v224
  %v264 = vunpack.c.l.b16 %v225
  %v265 = vunpack.c.l.b16 %v226
  %v266 = vpack.c.b16 %v251, %v250
  %v267 = vpack.c.b16 %v253, %v252
  %v268 = vpack.c.b16 %v255, %v254
  %v269 = vpack.c.b16 %v257, %v256
  %v270 = vpack.c.b16 %v259, %v258
  %v271 = vpack.c.b16 %v261, %v260
  %v272 = vpack.c.b16 %v263, %v262
  %v273 = vpack.c.b16 %v265, %v264
  %282 = vmatprep.subr.bf16.mxu0 0
  %283 = vmatpush1.bf16.msra.mxu0 %v266
  %284 = vmatprep.subr.bf16.mxu0 0
  %285 = vmatpush1.bf16.msra.mxu0 %v267
  %286 = vmatprep.subr.bf16.mxu0 0
  %287 = vmatpush1.bf16.msra.mxu0 %v268
  %288 = vmatprep.subr.bf16.mxu0 0
  %289 = vmatpush1.bf16.msra.mxu0 %v269
  %290 = vmatprep.subr.bf16.mxu0 0
  %291 = vmatpush1.bf16.msra.mxu0 %v270
  %292 = vmatprep.subr.bf16.mxu0 0
  %293 = vmatpush1.bf16.msra.mxu0 %v271
  %294 = vmatprep.subr.bf16.mxu0 0
  %295 = vmatpush1.bf16.msra.mxu0 %v272
  %296 = vmatprep.subr.bf16.mxu0 0
  %297 = vmatpush1.bf16.msra.mxu0 %v273
  %298 = vmatprep.subr.bf16.mxu0 0
  %299 = vmatpush1.bf16.msra.mxu0 0
  %300 = vmatprep.subr.bf16.mxu0 0
  %301 = vmatpush1.bf16.msra.mxu0 0
  %302 = vmatprep.subr.bf16.mxu0 0
  %303 = vmatpush1.bf16.msra.mxu0 0
  %304 = vmatprep.subr.bf16.mxu0 0
  %305 = vmatpush1.bf16.msra.mxu0 0
  %306 = vmatprep.subr.bf16.mxu0 0
  %307 = vmatpush1.bf16.msra.mxu0 0
  %308 = vmatprep.subr.bf16.mxu0 0
  %309 = vmatpush1.bf16.msra.mxu0 0
  %310 = vmatprep.subr.bf16.mxu0 0
  %311 = vmatpush1.bf16.msra.mxu0 0
  %312 = vmatprep.subr.bf16.mxu0 0
  %313 = vmatpush1.bf16.msra.mxu0 0
  %314 = vmatprep.mubr.bf16.mxu0 0
  %315 = vmatmul.mubr.bf16.gmra.mrb[0].mxu0 %v210
  %v316 = vpop.f32.mrb[0].mxu0
  %v317 = vadd.f32 %v232, %v316
  %v318 = vpop.f32.mrb[0].mxu0
  %v319 = vpop.f32.mrb[0].mxu0
  %v320 = vpop.f32.mrb[0].mxu0
  %321 = vdwg.mxu0
  %v322 = vmax.f32 %v317, 0.0
  %v323 = vpack.c.bf16 %v322, %v322
  %v324 = vld [vmem:[%s7] sm:$0xf]
  %v325 = vld [vmem:[%s7 + $0x4] sm:$0xf]
  %v326 = vld [vmem:[%s7 + $0x8] sm:$0xf]
  %v327 = vld [vmem:[%s7 + $0xc] sm:$0xf]
  %v328 = vld [vmem:[%s7 + $0x10] sm:$0xf]
  %v329 = vld [vmem:[%s7 + $0x14] sm:$0xf]
  %v330 = vld [vmem:[%s7 + $0x18] sm:$0xf]
  %v331 = vld [vmem:[%s7 + $0x1c] sm:$0xf]
  %v332 = vld [vmem:[%s7 + $0x20] sm:$0xf]
  %v333 = vld [vmem:[%s7 + $0x24] sm:$0xf]
  %v334 = vld [vmem:[%s7 + $0x28] sm:$0xf]
  %v335 = vld [vmem:[%s7 + $0x2c] sm:$0xf]
  %v336 = vld [vmem:[%s7 + $0x30] sm:$0xf]
  %v337 = vld [vmem:[%s7 + $0x34] sm:$0xf]
  %v338 = vld [vmem:[%s7 + $0x38] sm:$0xf]
  %v339 = vld [vmem:[%s7 + $0x3c] sm:$0xf]
  %v340 = vld [vmem:[%s8] sm:$0x1]
  %v342 = vlaneseq
  %v343 = vshrl.u32 %v342, 7
  %v344 = vsub.s32 0, %v343
  %v345 = vrot.slane %v340, %v344
  %v363 = vunpack.c.l.b16 %v324
  %v364 = vunpack.c.l.b16 %v325
  %v365 = vunpack.c.l.b16 %v326
  %v366 = vunpack.c.l.b16 %v327
  %v367 = vunpack.c.l.b16 %v328
  %v368 = vunpack.c.l.b16 %v329
  %v369 = vunpack.c.l.b16 %v330
  %v370 = vunpack.c.l.b16 %v331
  %v371 = vunpack.c.l.b16 %v332
  %v372 = vunpack.c.l.b16 %v333
  %v373 = vunpack.c.l.b16 %v334
  %v374 = vunpack.c.l.b16 %v335
  %v375 = vunpack.c.l.b16 %v336
  %v376 = vunpack.c.l.b16 %v337
  %v377 = vunpack.c.l.b16 %v338
  %v378 = vunpack.c.l.b16 %v339
  %v379 = vpack.c.b16 %v364, %v363
  %v380 = vpack.c.b16 %v366, %v365
  %v381 = vpack.c.b16 %v368, %v367
  %v382 = vpack.c.b16 %v370, %v369
  %v383 = vpack.c.b16 %v372, %v371
  %v384 = vpack.c.b16 %v374, %v373
  %v385 = vpack.c.b16 %v376, %v375
  %v386 = vpack.c.b16 %v378, %v377
  %395 = vmatprep.subr.bf16.mxu0 0
  %396 = vmatpush1.bf16.msra.mxu0 %v379
  %397 = vmatprep.subr.bf16.mxu0 0
  %398 = vmatpush1.bf16.msra.mxu0 %v380
  %399 = vmatprep.subr.bf16.mxu0 0
  %400 = vmatpush1.bf16.msra.mxu0 %v381
  %401 = vmatprep.subr.bf16.mxu0 0
  %402 = vmatpush1.bf16.msra.mxu0 %v382
  %403 = vmatprep.subr.bf16.mxu0 0
  %404 = vmatpush1.bf16.msra.mxu0 %v383
  %405 = vmatprep.subr.bf16.mxu0 0
  %406 = vmatpush1.bf16.msra.mxu0 %v384
  %407 = vmatprep.subr.bf16.mxu0 0
  %408 = vmatpush1.bf16.msra.mxu0 %v385
  %409 = vmatprep.subr.bf16.mxu0 0
  %410 = vmatpush1.bf16.msra.mxu0 %v386
  %411 = vmatprep.subr.bf16.mxu0 0
  %412 = vmatpush1.bf16.msra.mxu0 0
  %413 = vmatprep.subr.bf16.mxu0 0
  %414 = vmatpush1.bf16.msra.mxu0 0
  %415 = vmatprep.subr.bf16.mxu0 0
  %416 = vmatpush1.bf16.msra.mxu0 0
  %417 = vmatprep.subr.bf16.mxu0 0
  %418 = vmatpush1.bf16.msra.mxu0 0
  %419 = vmatprep.subr.bf16.mxu0 0
  %420 = vmatpush1.bf16.msra.mxu0 0
  %421 = vmatprep.subr.bf16.mxu0 0
  %422 = vmatpush1.bf16.msra.mxu0 0
  %423 = vmatprep.subr.bf16.mxu0 0
  %424 = vmatpush1.bf16.msra.mxu0 0
  %425 = vmatprep.subr.bf16.mxu0 0
  %426 = vmatpush1.bf16.msra.mxu0 0
  %427 = vmatprep.mubr.bf16.mxu0 0
  %428 = vmatmul.mubr.bf16.gmra.mrb[0].mxu0 %v323
  %v429 = vpop.f32.mrb[0].mxu0
  %v430 = vadd.f32 %v345, %v429
  %v431 = vpop.f32.mrb[0].mxu0
  %v432 = vpop.f32.mrb[0].mxu0
  %v433 = vpop.f32.mrb[0].mxu0
  %434 = vdwg.mxu0
  %vm435 = vcmask 23552
  %436 = vst.msk [vmem:[%s9] sm:$0xff] %vm435, %v430
  // Predicated region
  $region38: #{mlp_forward.1} parent=0 // pred_check
    _
  $region39: #{mlp_forward.1} parent=0 // pred_check_branch
    %438 = sbr.rel (0) target = $region41
  $region40: #{mlp_forward.1} parent=0 // pred_region
    _
  $region41: #{mlp_forward.1} parent=0 // pred_fallthru
    _
  // Predicated region
  $region42: #{mlp_forward.1} parent=0 // pred_check
    _
  $region43: #{mlp_forward.1} parent=0 // pred_check_branch
    %440 = sbr.rel (0) target = $region45
  $region44: #{mlp_forward.1} parent=0 // pred_region
    _
  $region45: #{mlp_forward.1} parent=0 // pred_fallthru
    _

</llo_original>
